<compile_context>
chip_gen: v7x
topology: tpu7x:2x2x1
jax: 0.10.0
libtpu: 0.0.40
codegen_flags: <defaults>
</compile_context>

<pallas_src>
import jax
import jax.numpy as jnp
from jax.experimental import pallas as pl
from jax.experimental.pallas import tpu as pltpu

_LANE = 128
_MAX_BLK = 8192   # lanes (batch elements) per grid step
_ROWS = 16        # rows of the packed feature-major slab


def _quaternion_loss_kernel(scales_ref,     # SMEM (3,)  [rescale_trans, rescale_rot, 1/B]
                            slab_ref,       # VMEM (16, blk) packed feature-major inputs
                            out_ref,        # VMEM (1, 128) f32: [total, rot, transl, 0...]
                            tacc, racc):    # VMEM (1, 1) f32 accumulators
    step = pl.program_id(0)

    @pl.when(step == 0)
    def _():
        tacc[...] = jnp.zeros_like(tacc)
        racc[...] = jnp.zeros_like(racc)

    # Single block load + in-VMEM cast to f32 (inputs may be bf16/fp16).
    slab = slab_ref[...].astype(jnp.float32)          # (16, blk)
    tt = slab[0:3, :]      # target_transl
    tr = slab[3:7, :]      # target_rot
    te = slab[8:11, :]     # transl_err
    re = slab[11:15, :]    # rot_err

    # ---- translation: SmoothL1 (beta=1), single full 2-D reduce -----------------------
    # Zero-padded batch columns contribute exactly 0 (SmoothL1(0) = 0).
    diff = te - tt
    ad = jnp.abs(diff)
    sl1 = jnp.where(ad < 1.0, 0.5 * diff * diff, ad - 0.5)        # (3, blk)
    tacc[...] += jnp.sum(sl1, keepdims=True)                      # (1, 1)

    # ---- rotation: quaternion distance 2*atan2(||vec||, |w|) --------------------------
    # Exact component-wise product of rot_err with conj(target_rot); padded columns give
    # atan2(0, 0) = 0, so they contribute nothing to the sum.
    q0, q1, q2, q3 = re[0:1, :], re[1:2, :], re[2:3, :], re[3:4, :]
    r0 = tr[0:1, :]
    r1 = -tr[1:2, :]
    r2 = -tr[2:3, :]
    r3 = -tr[3:4, :]
    t0 = r0 * q0 - r1 * q1 - r2 * q2 - r3 * q3
    t1 = r0 * q1 + r1 * q0 - r2 * q3 + r3 * q2
    t2 = r0 * q2 + r1 * q3 + r2 * q0 - r3 * q1
    t3 = r0 * q3 - r1 * q2 + r2 * q1 + r3 * q0
    vec_norm = jnp.sqrt(t1 * t1 + t2 * t2 + t3 * t3)              # (1, blk)
    dist = 2.0 * jnp.arctan2(vec_norm, jnp.abs(t0))               # (1, blk)
    racc[...] += jnp.sum(dist, axis=1, keepdims=True)             # (1, 1)

    # ---- finalize on the last grid step ------------------------------------------------
    @pl.when(step == pl.num_programs(0) - 1)
    def _():
        rs_t = scales_ref[0]
        rs_r = scales_ref[1]
        inv_b = scales_ref[2]
        loss_transl = tacc[...] * (inv_b * 100.0)                 # (1, 1)
        loss_rot = racc[...] * inv_b                              # (1, 1)
        # Match PyTorch: a loss whose rescale factor is exactly 0.0 is reported as 0.
        loss_transl = jnp.where(rs_t != 0.0, loss_transl, 0.0)
        loss_rot = jnp.where(rs_r != 0.0, loss_rot, 0.0)
        total = rs_t * loss_transl + rs_r * loss_rot              # (1, 1)

        lane = jax.lax.broadcasted_iota(jnp.int32, (1, _LANE), 1)
        out_ref[...] = jnp.where(
            lane == 0, total,
            jnp.where(lane == 1, loss_rot,
                      jnp.where(lane == 2, loss_transl, 0.0)))


@jax.jit
def quaternion_loss(target_transl, target_rot, transl_err, rot_err,
                    rescale_trans=1.0, rescale_rot=1.0):
    """Pallas implementation of QuaternionLoss.forward. Returns (total, rot, transl)."""
    B = target_transl.shape[0]
    dtype = jnp.result_type(target_transl, target_rot, transl_err, rot_err)

    # Block size: a multiple of 128 lanes, capped at _MAX_BLK; pad batch to a block multiple.
    blk = min(_MAX_BLK, ((B + _LANE - 1) // _LANE) * _LANE)
    b_pad = ((B + blk - 1) // blk) * blk
    pad = b_pad - B

    # Pack everything into one feature-major 16-row slab (source dtype; f32 cast in-kernel).
    zrow = jnp.zeros((1, B), dtype)
    slab = jnp.concatenate([
        target_transl.astype(dtype).T,   # rows 0-2
        target_rot.astype(dtype).T,      # rows 3-6
        zrow,                            # row 7  (pad)
        transl_err.astype(dtype).T,      # rows 8-10
        rot_err.astype(dtype).T,         # rows 11-14
        zrow,                            # row 15 (pad)
    ], axis=0)                           # (16, B)
    if pad:
        slab = jnp.pad(slab, ((0, 0), (0, pad)))   # (16, b_pad), zero columns are inert

    scales = jnp.stack([jnp.asarray(rescale_trans, jnp.float32),
                        jnp.asarray(rescale_rot, jnp.float32),
                        jnp.asarray(1.0 / B, jnp.float32)])        # SMEM (3,)

    grid_spec = pltpu.PrefetchScalarGridSpec(
        num_scalar_prefetch=0,
        grid=(b_pad // blk,),
        in_specs=[
            pl.BlockSpec(memory_space=pltpu.MemorySpace.SMEM),     # scales (3,)
            pl.BlockSpec((_ROWS, blk), lambda i: (0, i)),          # packed slab
        ],
        out_specs=pl.BlockSpec((1, _LANE), lambda i: (0, 0)),
        scratch_shapes=[pltpu.VMEM((1, 1), jnp.float32),           # transl sum
                        pltpu.VMEM((1, 1), jnp.float32)],          # rot sum
    )

    out = pl.pallas_call(
        _quaternion_loss_kernel,
        out_shape=jax.ShapeDtypeStruct((1, _LANE), jnp.float32),
        grid_spec=grid_spec,
        compiler_params=pltpu.CompilerParams(dimension_semantics=("arbitrary",)),
    )(scales, slab)

    res = out[0, :3]   # one lane-slice; fuses with the surrounding jit
    return res[0], res[1], res[2]


def _reference(target_transl, target_rot, transl_err, rot_err,
               rescale_trans=1.0, rescale_rot=1.0):
    # Pure-JAX reference mirroring the PyTorch module, for verification.
    diff = transl_err - target_transl
    ad = jnp.abs(diff)
    sl1 = jnp.where(ad < 1.0, 0.5 * diff * diff, ad - 0.5)
    loss_transl = jnp.mean(jnp.sum(sl1, axis=1)) * 100.0 if rescale_trans != 0.0 else 0.0

    q, r = rot_err, target_rot
    rinv = jnp.concatenate([r[:, :1], -r[:, 1:]], axis=1)
    r0, r1, r2, r3 = rinv[:, 0], rinv[:, 1], rinv[:, 2], rinv[:, 3]
    q0, q1, q2, q3 = q[:, 0], q[:, 1], q[:, 2], q[:, 3]
    t0 = r0 * q0 - r1 * q1 - r2 * q2 - r3 * q3
    t1 = r0 * q1 + r1 * q0 - r2 * q3 + r3 * q2
    t2 = r0 * q2 + r1 * q3 + r2 * q0 - r3 * q1
    t3 = r0 * q3 - r1 * q2 + r2 * q1 + r3 * q0
    dist = 2.0 * jnp.arctan2(jnp.sqrt(t1 * t1 + t2 * t2 + t3 * t3), jnp.abs(t0))
    loss_rot = jnp.mean(dist) if rescale_rot != 0.0 else 0.0

    total = rescale_trans * loss_transl + rescale_rot * loss_rot
    return total, loss_rot, loss_transl


if __name__ == "__main__":
    B = 8

    key = jax.random.PRNGKey(0)
    k1, k2, k3, k4 = jax.random.split(key, 4)
    target_transl = jax.random.normal(k1, (B, 3), dtype=jnp.float32)
    transl_err = jax.random.normal(k3, (B, 3), dtype=jnp.float32)

    def _rand_quat(k):
        q = jax.random.normal(k, (B, 4), dtype=jnp.float32)
        return q / jnp.linalg.norm(q, axis=1, keepdims=True)

    target_rot = _rand_quat(k2)
    rot_err = _rand_quat(k4)

    # Case 1: default scales.
    total, loss_rot, loss_transl = quaternion_loss(
        target_transl, target_rot, transl_err, rot_err,
        rescale_trans=1.0, rescale_rot=1.0)
    jax.block_until_ready((total, loss_rot, loss_transl))
    ref_total, ref_rot, ref_transl = _reference(
        target_transl, target_rot, transl_err, rot_err, 1.0, 1.0)
    assert jnp.allclose(total, ref_total, rtol=1e-5, atol=1e-5), (total, ref_total)
    assert jnp.allclose(loss_rot, ref_rot, rtol=1e-5, atol=1e-5), (loss_rot, ref_rot)
    assert jnp.allclose(loss_transl, ref_transl, rtol=1e-5, atol=1e-5), (loss_transl, ref_transl)

    # Case 2: different runtime scales (exercises SMEM-scalar path, same compiled kernel).
    total2, rot2, transl2 = quaternion_loss(
        target_transl, target_rot, transl_err, rot_err,
        rescale_trans=2.0, rescale_rot=0.5)
    jax.block_until_ready((total2, rot2, transl2))
    rtot2, rrot2, rtr2 = _reference(
        target_transl, target_rot, transl_err, rot_err, 2.0, 0.5)
    assert jnp.allclose(total2, rtot2, rtol=1e-5, atol=1e-5), (total2, rtot2)
    assert jnp.allclose(rot2, rrot2, rtol=1e-5, atol=1e-5), (rot2, rrot2)
    assert jnp.allclose(transl2, rtr2, rtol=1e-5, atol=1e-5), (transl2, rtr2)

    # Case 3: zero translation rescale (loss_transl must be reported as 0).
    total3, rot3, transl3 = quaternion_loss(
        target_transl, target_rot, transl_err, rot_err,
        rescale_trans=0.0, rescale_rot=1.0)
    jax.block_until_ready((total3, rot3, transl3))
    rtot3, rrot3, rtr3 = _reference(
        target_transl, target_rot, transl_err, rot_err, 0.0, 1.0)
    assert jnp.allclose(total3, rtot3, rtol=1e-5, atol=1e-5), (total3, rtot3)
    assert jnp.allclose(rot3, rrot3, rtol=1e-5, atol=1e-5), (rot3, rrot3)
    assert jnp.allclose(transl3, rtr3, rtol=1e-5, atol=1e-5), (transl3, rtr3)

    print("KERNEL_OK")
</pallas_src>

<mosaic_0001>
module attributes {stable_mosaic.version = 11 : i64} {
  func.func @_quaternion_loss_kernel(%arg0: i32, %arg1: memref<3xf32, #tpu.memory_space<smem>>, %arg2: memref<16x128xf32, #tpu.memory_space<vmem>>, %arg3: memref<1x128xf32, #tpu.memory_space<vmem>>, %arg4: memref<1x1xf32, #tpu.memory_space<vmem>>, %arg5: memref<1x1xf32, #tpu.memory_space<vmem>>) attributes {dimension_semantics = [#tpu.dimension_semantics<arbitrary>], iteration_bounds = array<i64: 1>, scalar_prefetch = 0 : i64, scratch_operands = 2 : i64, tpu.core_type = #tpu.core_type<tc>, window_params = [{transform_indices = @transform_0, window_bounds = array<i64: 3>}, {transform_indices = @transform_1, window_bounds = array<i64: 16, 128>}, {pipeline_mode = #tpu.pipeline_mode<synchronous>, transform_indices = @transform_2, window_bounds = array<i64: 1, 128>}]} {
    %c0_i32 = arith.constant 0 : i32
    %0 = arith.cmpi eq, %arg0, %c0_i32 : i32
    %1 = arith.extui %0 : i1 to i32
    %c0_i32_0 = arith.constant 0 : i32
    %2 = arith.cmpi ne, %1, %c0_i32_0 : i32
    scf.if %2 {
      %cst_20 = arith.constant 0.000000e+00 : f32
      %86 = vector.broadcast %cst_20 : f32 to vector<1x1xf32>
      %c0_21 = arith.constant 0 : index
      %c0_22 = arith.constant 0 : index
      %87 = vector.load %arg4[%c0_21, %c0_22] : memref<1x1xf32, #tpu.memory_space<vmem>>, vector<1x1xf32>
      tpu.vector_store %arg4[%c0_21, %c0_22], %86 {strides = array<i32>} : memref<1x1xf32, #tpu.memory_space<vmem>>, vector<1x1xf32>,
      %cst_23 = arith.constant 0.000000e+00 : f32
      %88 = vector.broadcast %cst_23 : f32 to vector<1x1xf32>
      %c0_24 = arith.constant 0 : index
      %c0_25 = arith.constant 0 : index
      %89 = vector.load %arg5[%c0_24, %c0_25] : memref<1x1xf32, #tpu.memory_space<vmem>>, vector<1x1xf32>
      tpu.vector_store %arg5[%c0_24, %c0_25], %88 {strides = array<i32>} : memref<1x1xf32, #tpu.memory_space<vmem>>, vector<1x1xf32>,
    } else {
    }
    %c0 = arith.constant 0 : index
    %c0_1 = arith.constant 0 : index
    %3 = vector.load %arg2[%c0, %c0_1] : memref<16x128xf32, #tpu.memory_space<vmem>>, vector<16x128xf32>
    %4 = vector.extract_strided_slice %3 {offsets = [0, 0], sizes = [3, 128], strides = [1, 1]} : vector<16x128xf32> to vector<3x128xf32>
    %5 = vector.extract_strided_slice %3 {offsets = [3, 0], sizes = [4, 128], strides = [1, 1]} : vector<16x128xf32> to vector<4x128xf32>
    %6 = vector.extract_strided_slice %3 {offsets = [8, 0], sizes = [3, 128], strides = [1, 1]} : vector<16x128xf32> to vector<3x128xf32>
    %7 = vector.extract_strided_slice %3 {offsets = [11, 0], sizes = [4, 128], strides = [1, 1]} : vector<16x128xf32> to vector<4x128xf32>
    %8 = arith.subf %6, %4 : vector<3x128xf32>
    %9 = math.absf %8 : vector<3x128xf32>
    %cst = arith.constant 1.000000e+00 : f32
    %10 = vector.broadcast %cst : f32 to vector<3x128xf32>
    %11 = arith.cmpf olt, %9, %10 : vector<3x128xf32>
    %cst_2 = arith.constant 5.000000e-01 : f32
    %12 = vector.broadcast %cst_2 : f32 to vector<3x128xf32>
    %13 = arith.mulf %12, %8 : vector<3x128xf32>
    %14 = arith.mulf %13, %8 : vector<3x128xf32>
    %cst_3 = arith.constant 5.000000e-01 : f32
    %15 = vector.broadcast %cst_3 : f32 to vector<3x128xf32>
    %16 = arith.subf %9, %15 : vector<3x128xf32>
    %17 = arith.select %11, %14, %16 : vector<3x128xi1>, vector<3x128xf32>
    %c0_4 = arith.constant 0 : index
    %c0_5 = arith.constant 0 : index
    %18 = vector.load %arg4[%c0_4, %c0_5] : memref<1x1xf32, #tpu.memory_space<vmem>>, vector<1x1xf32>
    %19 = vector.shape_cast %17 : vector<3x128xf32> to vector<1x3x128xf32>
    %cst_6 = arith.constant dense<0.000000e+00> : vector<1xf32>
    %20 = vector.multi_reduction <add>, %19, %cst_6 [1, 2] : vector<1x3x128xf32> to vector<1xf32>
    %21 = vector.shape_cast %20 : vector<1xf32> to vector<1x1x1xf32>
    %22 = vector.extract %21[0, 0, 0] : f32 from vector<1x1x1xf32>
    %23 = vector.broadcast %22 : f32 to vector<1x1xf32>
    %24 = arith.addf %18, %23 : vector<1x1xf32>
    %c0_7 = arith.constant 0 : index
    %c0_8 = arith.constant 0 : index
    %25 = vector.load %arg4[%c0_7, %c0_8] : memref<1x1xf32, #tpu.memory_space<vmem>>, vector<1x1xf32>
    tpu.vector_store %arg4[%c0_7, %c0_8], %24 {strides = array<i32>} : memref<1x1xf32, #tpu.memory_space<vmem>>, vector<1x1xf32>,
    %26 = vector.extract_strided_slice %7 {offsets = [0, 0], sizes = [1, 128], strides = [1, 1]} : vector<4x128xf32> to vector<1x128xf32>
    %27 = vector.extract_strided_slice %7 {offsets = [1, 0], sizes = [1, 128], strides = [1, 1]} : vector<4x128xf32> to vector<1x128xf32>
    %28 = vector.extract_strided_slice %7 {offsets = [2, 0], sizes = [1, 128], strides = [1, 1]} : vector<4x128xf32> to vector<1x128xf32>
    %29 = vector.extract_strided_slice %7 {offsets = [3, 0], sizes = [1, 128], strides = [1, 1]} : vector<4x128xf32> to vector<1x128xf32>
    %30 = vector.extract_strided_slice %5 {offsets = [0, 0], sizes = [1, 128], strides = [1, 1]} : vector<4x128xf32> to vector<1x128xf32>
    %31 = vector.extract_strided_slice %5 {offsets = [1, 0], sizes = [1, 128], strides = [1, 1]} : vector<4x128xf32> to vector<1x128xf32>
    %cst_9 = arith.constant 0.000000e+00 : f32
    %32 = vector.broadcast %cst_9 : f32 to vector<1x128xf32>
    %33 = arith.subf %32, %31 : vector<1x128xf32>
    %34 = vector.extract_strided_slice %5 {offsets = [2, 0], sizes = [1, 128], strides = [1, 1]} : vector<4x128xf32> to vector<1x128xf32>
    %cst_10 = arith.constant 0.000000e+00 : f32
    %35 = vector.broadcast %cst_10 : f32 to vector<1x128xf32>
    %36 = arith.subf %35, %34 : vector<1x128xf32>
    %37 = vector.extract_strided_slice %5 {offsets = [3, 0], sizes = [1, 128], strides = [1, 1]} : vector<4x128xf32> to vector<1x128xf32>
    %cst_11 = arith.constant 0.000000e+00 : f32
    %38 = vector.broadcast %cst_11 : f32 to vector<1x128xf32>
    %39 = arith.subf %38, %37 : vector<1x128xf32>
    %40 = arith.mulf %30, %26 : vector<1x128xf32>
    %41 = arith.mulf %33, %27 : vector<1x128xf32>
    %42 = arith.subf %40, %41 : vector<1x128xf32>
    %43 = arith.mulf %36, %28 : vector<1x128xf32>
    %44 = arith.subf %42, %43 : vector<1x128xf32>
    %45 = arith.mulf %39, %29 : vector<1x128xf32>
    %46 = arith.subf %44, %45 : vector<1x128xf32>
    %47 = arith.mulf %30, %27 : vector<1x128xf32>
    %48 = arith.mulf %33, %26 : vector<1x128xf32>
    %49 = arith.addf %47, %48 : vector<1x128xf32>
    %50 = arith.mulf %36, %29 : vector<1x128xf32>
    %51 = arith.subf %49, %50 : vector<1x128xf32>
    %52 = arith.mulf %39, %28 : vector<1x128xf32>
    %53 = arith.addf %51, %52 : vector<1x128xf32>
    %54 = arith.mulf %30, %28 : vector<1x128xf32>
    %55 = arith.mulf %33, %29 : vector<1x128xf32>
    %56 = arith.addf %54, %55 : vector<1x128xf32>
    %57 = arith.mulf %36, %26 : vector<1x128xf32>
    %58 = arith.addf %56, %57 : vector<1x128xf32>
    %59 = arith.mulf %39, %27 : vector<1x128xf32>
    %60 = arith.subf %58, %59 : vector<1x128xf32>
    %61 = arith.mulf %30, %29 : vector<1x128xf32>
    %62 = arith.mulf %33, %28 : vector<1x128xf32>
    %63 = arith.subf %61, %62 : vector<1x128xf32>
    %64 = arith.mulf %36, %27 : vector<1x128xf32>
    %65 = arith.addf %63, %64 : vector<1x128xf32>
    %66 = arith.mulf %39, %26 : vector<1x128xf32>
    %67 = arith.addf %65, %66 : vector<1x128xf32>
    %68 = arith.mulf %53, %53 : vector<1x128xf32>
    %69 = arith.mulf %60, %60 : vector<1x128xf32>
    %70 = arith.addf %68, %69 : vector<1x128xf32>
    %71 = arith.mulf %67, %67 : vector<1x128xf32>
    %72 = arith.addf %70, %71 : vector<1x128xf32>
    %73 = math.sqrt %72 : vector<1x128xf32>
    %74 = math.absf %46 : vector<1x128xf32>
    %75 = math.atan2 %73, %74 : vector<1x128xf32>
    %cst_12 = arith.constant 2.000000e+00 : f32
    %76 = vector.broadcast %cst_12 : f32 to vector<1x128xf32>
    %77 = arith.mulf %76, %75 : vector<1x128xf32>
    %c0_13 = arith.constant 0 : index
    %c0_14 = arith.constant 0 : index
    %78 = vector.load %arg5[%c0_13, %c0_14] : memref<1x1xf32, #tpu.memory_space<vmem>>, vector<1x1xf32>
    %cst_15 = arith.constant dense<0.000000e+00> : vector<1xf32>
    %79 = vector.multi_reduction <add>, %77, %cst_15 [1] : vector<1x128xf32> to vector<1xf32>
    %80 = vector.shape_cast %79 : vector<1xf32> to vector<1x1xf32>
    %81 = arith.addf %78, %80 : vector<1x1xf32>
    %c0_16 = arith.constant 0 : index
    %c0_17 = arith.constant 0 : index
    %82 = vector.load %arg5[%c0_16, %c0_17] : memref<1x1xf32, #tpu.memory_space<vmem>>, vector<1x1xf32>
    tpu.vector_store %arg5[%c0_16, %c0_17], %81 {strides = array<i32>} : memref<1x1xf32, #tpu.memory_space<vmem>>, vector<1x1xf32>,
    %c0_i32_18 = arith.constant 0 : i32
    %83 = arith.cmpi eq, %arg0, %c0_i32_18 : i32
    %84 = arith.extui %83 : i1 to i32
    %c0_i32_19 = arith.constant 0 : i32
    %85 = arith.cmpi ne, %84, %c0_i32_19 : i32
    scf.if %85 {
      %c0_20 = arith.constant 0 : index
      %86 = memref.load %arg1[%c0_20] : memref<3xf32, #tpu.memory_space<smem>>
      %c1 = arith.constant 1 : index
      %87 = memref.load %arg1[%c1] : memref<3xf32, #tpu.memory_space<smem>>
      %c2 = arith.constant 2 : index
      %88 = memref.load %arg1[%c2] : memref<3xf32, #tpu.memory_space<smem>>
      %c0_21 = arith.constant 0 : index
      %c0_22 = arith.constant 0 : index
      %89 = vector.load %arg4[%c0_21, %c0_22] : memref<1x1xf32, #tpu.memory_space<vmem>>, vector<1x1xf32>
      %cst_23 = arith.constant 1.000000e+02 : f32
      %90 = arith.mulf %88, %cst_23 : f32
      %91 = vector.broadcast %90 : f32 to vector<1x1xf32>
      %92 = arith.mulf %89, %91 : vector<1x1xf32>
      %c0_24 = arith.constant 0 : index
      %c0_25 = arith.constant 0 : index
      %93 = vector.load %arg5[%c0_24, %c0_25] : memref<1x1xf32, #tpu.memory_space<vmem>>, vector<1x1xf32>
      %94 = vector.broadcast %88 : f32 to vector<1x1xf32>
      %95 = arith.mulf %93, %94 : vector<1x1xf32>
      %cst_26 = arith.constant 0.000000e+00 : f32
      %96 = arith.cmpf one, %86, %cst_26 : f32
      %cst_27 = arith.constant 0.000000e+00 : f32
      %97 = vector.broadcast %cst_27 : f32 to vector<1x1xf32>
      %98 = arith.select %96, %92, %97 : vector<1x1xf32>
      %cst_28 = arith.constant 0.000000e+00 : f32
      %99 = arith.cmpf one, %87, %cst_28 : f32
      %cst_29 = arith.constant 0.000000e+00 : f32
      %100 = vector.broadcast %cst_29 : f32 to vector<1x1xf32>
      %101 = arith.select %99, %95, %100 : vector<1x1xf32>
      %102 = vector.broadcast %86 : f32 to vector<1x1xf32>
      %103 = arith.mulf %102, %98 : vector<1x1xf32>
      %104 = vector.broadcast %87 : f32 to vector<1x1xf32>
      %105 = arith.mulf %104, %101 : vector<1x1xf32>
      %106 = arith.addf %103, %105 : vector<1x1xf32>
      %107 = tpu.iota {dimensions = array<i32: 1>} : vector<1x128xi32>
      %c0_i32_30 = arith.constant 0 : i32
      %108 = vector.broadcast %c0_i32_30 : i32 to vector<1x128xi32>
      %109 = arith.cmpi eq, %107, %108 : vector<1x128xi32>
      %c1_i32 = arith.constant 1 : i32
      %110 = vector.broadcast %c1_i32 : i32 to vector<1x128xi32>
      %111 = arith.cmpi eq, %107, %110 : vector<1x128xi32>
      %c2_i32 = arith.constant 2 : i32
      %112 = vector.broadcast %c2_i32 : i32 to vector<1x128xi32>
      %113 = arith.cmpi eq, %107, %112 : vector<1x128xi32>
      %cst_31 = arith.constant 0.000000e+00 : f32
      %114 = vector.shape_cast %98 : vector<1x1xf32> to vector<1x1xf32>
      %115 = vector.broadcast %114 : vector<1x1xf32> to vector<1x128xf32>
      %116 = vector.broadcast %cst_31 : f32 to vector<1x128xf32>
      %117 = arith.select %113, %115, %116 : vector<1x128xi1>, vector<1x128xf32>
      %118 = vector.shape_cast %101 : vector<1x1xf32> to vector<1x1xf32>
      %119 = vector.broadcast %118 : vector<1x1xf32> to vector<1x128xf32>
      %120 = arith.select %111, %119, %117 : vector<1x128xi1>, vector<1x128xf32>
      %121 = vector.shape_cast %106 : vector<1x1xf32> to vector<1x1xf32>
      %122 = vector.broadcast %121 : vector<1x1xf32> to vector<1x128xf32>
      %123 = arith.select %109, %122, %120 : vector<1x128xi1>, vector<1x128xf32>
      %c0_32 = arith.constant 0 : index
      %c0_33 = arith.constant 0 : index
      %124 = vector.load %arg3[%c0_32, %c0_33] : memref<1x128xf32, #tpu.memory_space<vmem>>, vector<1x128xf32>
      tpu.vector_store %arg3[%c0_32, %c0_33], %123 {strides = array<i32>} : memref<1x128xf32, #tpu.memory_space<vmem>>, vector<1x128xf32>,
    } else {
    }
    return
  }
  func.func @transform_0(%arg0: i32) -> i32 {
    %c0_i32 = arith.constant 0 : i32
    %c0_i32_0 = arith.constant 0 : i32
    return %c0_i32 : i32
  }
  func.func @transform_1(%arg0: i32) -> (i32, i32) {
    %c0_i32 = arith.constant 0 : i32
    %c0_i32_0 = arith.constant 0 : i32
    return %c0_i32, %arg0 : i32, i32
  }
  func.func @transform_2(%arg0: i32) -> (i32, i32) {
    %c0_i32 = arith.constant 0 : i32
    %c0_i32_0 = arith.constant 0 : i32
    %c0_i32_1 = arith.constant 0 : i32
    return %c0_i32, %c0_i32_0 : i32, i32
  }
}

</mosaic_0001>

<llo_original>
// kernel: quaternion_loss.1
$region0: #{quaternion_loss.1}
  #allocation0 [shape = 'u32[]', space=smem, size = 0x4, offset = 0x4, fixed_abs, tag = 'smem constant byte address 0x4 - core index']
  #allocation1 [shape = 'u32[144,128]{1,0:T(1,128)}', space=vmem, size = 0x12000, scoped, tag = 'internal scratch']
  #allocation2 [shape = 'f32[1,1]{1,0:T(1,128)}', space=vmem, size = 0x200, scoped, tag = 'scratch operand']
  #allocation3 [shape = 'f32[1,1]{1,0:T(1,128)}', space=vmem, size = 0x200, scoped, tag = 'scratch operand']
  %s0 = inlined_call_operand.vmem [shape: f32[3], index: 0, kind: input, shape index: {}]
  %s1 = inlined_call_operand.vmem [shape: f32[16,128], index: 1, kind: input, shape index: {}]
  %s2 = inlined_call_operand.vmem [shape: f32[1,128], index: 2, kind: output, shape index: {}]
  %s3 = sld [smem:[#allocation0]]
  $region30: #{quaternion_loss.1} parent=0
    _
  %s5 = ssub.s32 1, %s3
  %s6 = scalar_select 0, %s5, %s3
  $region1: #{quaternion_loss.1} parent=0
    #allocation4 [shape = 'u8[512]{0}', space=smem, size = 0x200, scoped, tag = 'input window, operand 0, single buffered']
    #allocation5 [shape = 's32[1]{0}', space=sflag, size = 0x4, scoped, tag = 'scoped memory for quaternion_loss.1']
    %7 = vsyncpa [#allocation5], 0
    // Predicated region
    $region2: #{quaternion_loss.1} parent=1 // pred_check
      _
    $region3: #{quaternion_loss.1} parent=1 // pred_check_branch
      %9 = sbr.rel (0) target = $region5
    $region4: #{quaternion_loss.1} parent=1 // pred_region
      %s11 = ssub.s32 16, 16
      %12 = vsyncadd [#allocation5], %s11
      %s14 = sshll.u32 %s0, 4
      %s15 = int_to_ptr.vmem [resolvable:$true] %s14
      %17 = dma.vmem_to_smem %s15, 16, [#allocation4], [#allocation5]
    $region5: #{quaternion_loss.1} parent=1 // pred_fallthru
      _
    // Predicated region
    $region6: #{quaternion_loss.1} parent=1 // pred_check
      _
    $region7: #{quaternion_loss.1} parent=1 // pred_check_branch
      %19 = sbr.rel (0) target = $region9
    $region8: #{quaternion_loss.1} parent=1 // pred_region
      _
    $region9: #{quaternion_loss.1} parent=1 // pred_fallthru
      _
    // Predicated region
    $region10: #{quaternion_loss.1} parent=1 // pred_check
      _
    $region11: #{quaternion_loss.1} parent=1 // pred_check_branch
      %21 = sbr.rel (0) target = $region13
    $region12: #{quaternion_loss.1} parent=1 // pred_region
      %22 = dma.done [#allocation5], 16
    $region13: #{quaternion_loss.1} parent=1 // pred_fallthru
      _
    %23 = sfence
    %p24 = scmp.eq.s32.totalorder 0, 0
    // Predicated region
    $region14: #{quaternion_loss.1} parent=1 // pred_check
      %p25 = pneg %p24
    $region15: #{quaternion_loss.1} parent=1 // pred_check_branch
      %27 = sbr.rel (%p25) target = $region17
    $region16: #{quaternion_loss.1} parent=1 // pred_region
      %vm28 = vcmask 0
      %29 = vst.msk [vmem:[#allocation2] sm:$0x1] %vm28, 0.0
      %30 = vst.msk [vmem:[#allocation3] sm:$0x1] %vm28, 0.0
    $region17: #{quaternion_loss.1} parent=1 // pred_fallthru
      _
    %v31 = vld [vmem:[%s1] sm:$0xff]
    %v32 = vld [vmem:[%s1 + $0x8] sm:$0xff]
    %v33 = vsub.f32 %v32, %v31
    %v34 = vand.u32 2147483647, %v33
    %vm35 = vcmp.lt.f32.partialorder %v34, 1.0
    %v36 = vmul.f32 %v33, 0.5
    %v37 = vmul.f32 %v36, %v33
    %v38 = vsub.f32 %v34, 0.5
    %v39 = vsel %vm35, %v37, %v38
    %v40 = vld [vmem:[#allocation2] sm:$0x1]
    %vm41 = vcmask 1042432
    %v42 = vsel %vm41, %v39, 0.0
    %43 = vadd.xlane.f32.xlu0 %v42
    %v44 = vpop.xlane.xlu0 %43
    %v45 = vrot.slane %v44, 4
    %v46 = vadd.f32 %v44, %v45
    %v47 = vrot.slane %v46, 2
    %v48 = vadd.f32 %v46, %v47
    %v49 = vrot.slane %v48, 1
    %v50 = vadd.f32 %v48, %v49
    %s51 = vtos %v50
    %v52 = vstv %s51
    %v53 = vadd.f32 %v40, %v52
    %vm54 = vcmask 0
    %55 = vst.msk [vmem:[#allocation2] sm:$0x1] %vm54, %v53
    %v56 = vsub.f32 0.0, %v31
    %v57 = vmul.f32 %v31, %v32
    %v58 = vmul.f32 %v56, %v32
    %v60 = vrot.slane %v58, 1
    %v62 = vsub.f32 %v57, %v60
    %v63 = vrot.slane %v58, 2
    %v65 = vsub.f32 %v62, %v63
    %v66 = vrot.slane %v58, 3
    %v68 = vsub.f32 %v65, %v66
    %v70 = vrot.slane %v32, 1
    %v72 = vmul.f32 %v31, %v70
    %v73 = vrot.slane %v32, 7
    %v75 = vmul.f32 %v56, %v73
    %v77 = vrot.slane %v75, 1
    %v79 = vadd.f32 %v72, %v77
    %v80 = vmul.f32 %v56, %v70
    %v82 = vrot.slane %v80, 2
    %v84 = vsub.f32 %v79, %v82
    %v85 = vrot.slane %v75, 3
    %v87 = vadd.f32 %v84, %v85
    %v88 = vrot.slane %v32, 2
    %v90 = vmul.f32 %v31, %v88
    %v91 = vmul.f32 %v56, %v88
    %v93 = vrot.slane %v91, 1
    %v95 = vadd.f32 %v90, %v93
    %v96 = vrot.slane %v32, 6
    %v98 = vmul.f32 %v56, %v96
    %v100 = vrot.slane %v98, 2
    %v102 = vadd.f32 %v95, %v100
    %v103 = vrot.slane %v98, 3
    %v105 = vsub.f32 %v102, %v103
    %v106 = vrot.slane %v32, 3
    %v108 = vmul.f32 %v31, %v106
    %v109 = vrot.slane %v80, 1
    %v111 = vsub.f32 %v108, %v109
    %v112 = vrot.slane %v75, 2
    %v114 = vadd.f32 %v111, %v112
    %v115 = vrot.slane %v32, 5
    %v117 = vmul.f32 %v56, %v115
    %v119 = vrot.slane %v117, 3
    %v121 = vadd.f32 %v114, %v119
    %v122 = vmul.f32 %v87, %v87
    %v123 = vmul.f32 %v105, %v105
    %v124 = vadd.f32 %v122, %v123
    %v125 = vmul.f32 %v121, %v121
    %v126 = vadd.f32 %v124, %v125
    %v127 = vrsqrt.pop %v126
    %v128 = vmul.f32 %v126, %v127
    %vm129 = vcmp.eq.f32.partialorder %v126, inf
    %v130 = vsel %vm129, %v126, %v128
    %vm131 = vcmp.eq.f32.partialorder %v126, 0.0
    %v132 = vand.u32 %v126, 2147483648
    %v133 = vsel %vm131, %v132, %v130
    %v134 = vand.u32 2147483647, %v68
    %v135 = vand.u32 2147483647, %v134
    %v136 = vand.u32 2147483647, %v133
    %v137 = vmin.f32 %v135, %v136
    %v138 = vmax.f32 %v135, %v136
    %v139 = vrcp.pop %v138
    %v140 = vmul.f32 %v137, %v139
    %v141 = vmul.f32 %v140, %v140
    %v142 = vmul.f32 0.002785687, %v141
    %v143 = vadd.f32 %v142, -0.015866
    %v144 = vmul.f32 %v143, %v141
    %v145 = vadd.f32 %v144, 0.04247222
    %v146 = vmul.f32 %v145, %v141
    %v147 = vadd.f32 %v146, -0.074975304
    %v148 = vmul.f32 %v147, %v141
    %v149 = vadd.f32 %v148, 0.1064488
    %v150 = vmul.f32 %v149, %v141
    %v151 = vadd.f32 %v150, -0.14207031
    %v152 = vmul.f32 %v151, %v141
    %v153 = vadd.f32 %v152, 0.19993454
    %v154 = vmul.f32 %v153, %v141
    %v155 = vadd.f32 %v154, -0.33333147
    %v156 = vmul.f32 %v155, %v141
    %v157 = vmul.f32 %v156, %v140
    %v158 = vadd.f32 %v157, %v140
    %vm159 = vcmp.gt.f32.partialorder %v136, %v135
    %v160 = vsub.f32 1.5707964, %v158
    %v161 = vsel %vm159, %v160, %v158
    %vm162 = vcmp.lt.f32.partialorder %v134, 0.0
    %v163 = vsub.f32 3.1415927, %v161
    %v164 = vsel %vm162, %v163, %v161
    %vm165 = vcmp.eq.f32.partialorder %v133, 0.0
    %v166 = vsel %vm165, 0.0, %v164
    %vm167 = vcmp.ne.f32.partialorder %v134, %v134
    %vm168 = vcmp.ne.f32.partialorder %v133, %v133
    %vm169 = vmor %vm167, %vm168
    %v170 = vsel %vm169, nan, %v166
    %vm171 = vcmp.lt.f32.partialorder %v134, 0.0
    %v172 = vsel %vm171, 2.3561945, 0.7853982
    %vm173 = vcmp.eq.s32.totalorder %v135, inf
    %vm174 = vcmp.eq.s32.totalorder %v136, inf
    %vm175 = vmand %vm173, %vm174
    %v176 = vsel %vm175, %v172, %v170
    %v177 = vand.u32 2147483647, %v176
    %v178 = vand.u32 %v133, 2147483648
    %v179 = vor.u32 %v177, %v178
    %v180 = vmul.f32 %v179, 2.0
    %v181 = vld [vmem:[#allocation3] sm:$0x1]
    %vm182 = vcmask 1043459
    %v183 = vsel %vm182, %v180, 0.0
    %184 = vadd.xlane.f32.xlu0 %v183
    %v185 = vpop.xlane.xlu0 %184
    %v187 = vlaneseq
    %v188 = vshrl.u32 %v187, 7
    %v189 = vsub.s32 3, %v188
    %v190 = vrot.slane %v185, %v189
    %v192 = vadd.f32 %v181, %v190
    %193 = vst.msk [vmem:[#allocation3] sm:$0x1] %vm54, %v192
    // Predicated region
    $region18: #{quaternion_loss.1} parent=1 // pred_check
      %p194 = pneg %p24
    $region19: #{quaternion_loss.1} parent=1 // pred_check_branch
      %196 = sbr.rel (%p194) target = $region21
    $region20: #{quaternion_loss.1} parent=1 // pred_region
      %s197 = sld [smem:[#allocation4]]
      %s198 = sld [smem:[#allocation4 + $0x1]]
      %s199 = sld [smem:[#allocation4 + $0x2]]
      %v200 = vld [vmem:[#allocation2] sm:$0x1]
      %s201 = smul.f32 %s199, 100.0
      %v202 = vstv %s201
      %v203 = vmul.f32 %v200, %v202
      %v204 = vld [vmem:[#allocation3] sm:$0x1]
      %v205 = vstv %s199
      %v206 = vmul.f32 %v204, %v205
      %p207 = scmp.ne.f32.partialorder %s197, 0.0
      %s208 = scalar_select %p207, 1, 0
      %v209 = vstv %s208
      %vm210 = vcmp.eq.s32.totalorder %v209, 1
      %v211 = vsel %vm210, %v203, 0.0
      %p212 = scmp.ne.f32.partialorder %s198, 0.0
      %s213 = scalar_select %p212, 1, 0
      %v214 = vstv %s213
      %vm215 = vcmp.eq.s32.totalorder %v214, 1
      %v216 = vsel %vm215, %v206, 0.0
      %v217 = vstv %s197
      %v218 = vmul.f32 %v217, %v211
      %v219 = vstv %s198
      %v220 = vmul.f32 %v219, %v216
      %v221 = vadd.f32 %v218, %v220
      %v222 = vlaneseq
      %v223 = vand.u32 %v222, 127
      %vm224 = vcmp.eq.s32.totalorder %v223, 0
      %vm225 = vcmp.eq.s32.totalorder %v223, 1
      %vm226 = vcmp.eq.s32.totalorder %v223, 2
      %228 = vset.pattern.permute.xlu0 0
      %229 = vperm.xlu0 %228, %v211
      %v230 = vpop.permute.xlu0 %229
      %v232 = vlaneseq
      %v233 = vshrl.u32 %v232, 7
      %v234 = vsub.s32 0, %v233
      %v235 = vrot.slane %v230, %v234
      %v236 = vsel %vm226, %v235, 0.0
      %238 = vset.pattern.permute.xlu0 0
      %239 = vperm.xlu0 %238, %v216
      %v240 = vpop.permute.xlu0 %239
      %v242 = vlaneseq
      %v243 = vshrl.u32 %v242, 7
      %v244 = vsub.s32 0, %v243
      %v245 = vrot.slane %v240, %v244
      %v246 = vsel %vm225, %v245, %v236
      %248 = vset.pattern.permute.xlu0 0
      %249 = vperm.xlu0 %248, %v221
      %v250 = vpop.permute.xlu0 %249
      %v252 = vlaneseq
      %v253 = vshrl.u32 %v252, 7
      %v254 = vsub.s32 0, %v253
      %v255 = vrot.slane %v250, %v254
      %v256 = vsel %vm224, %v255, %v246
      %257 = vst [vmem:[%s2] sm:$0x1] %v256
    $region21: #{quaternion_loss.1} parent=1 // pred_fallthru
      _
    // Predicated region
    $region22: #{quaternion_loss.1} parent=1 // pred_check
      _
    $region23: #{quaternion_loss.1} parent=1 // pred_check_branch
      %259 = sbr.rel (0) target = $region25
    $region24: #{quaternion_loss.1} parent=1 // pred_region
      _
    $region25: #{quaternion_loss.1} parent=1 // pred_fallthru
      _
    // Predicated region
    $region26: #{quaternion_loss.1} parent=1 // pred_check
      _
    $region27: #{quaternion_loss.1} parent=1 // pred_check_branch
      %261 = sbr.rel (0) target = $region29
    $region28: #{quaternion_loss.1} parent=1 // pred_region
      _
    $region29: #{quaternion_loss.1} parent=1 // pred_fallthru
      _
    %262 = vsyncpa [#allocation5], 1

</llo_original>
